<compile_context>
chip_gen: v6e
topology: v6e:2x2x1
jax: 0.10.0
libtpu: 0.0.40
codegen_flags: <defaults>
</compile_context>

<pallas_src>
import functools
import math

import jax
import jax.numpy as jnp
from jax.experimental import pallas as pl
from jax.experimental.pallas import tpu as pltpu


# ---------------------------------------------------------------------------
# Buffer builder — identical to the torch registered buffer.
# ---------------------------------------------------------------------------
def make_positional_encoding(d_model: int, max_len: int = 5000) -> jnp.ndarray:
    """Returns pe of shape (max_len, 1, d_model), matching the torch buffer."""
    position = jnp.arange(max_len, dtype=jnp.float32)[:, None]              # (max_len, 1)
    div_term = jnp.exp(
        jnp.arange(0, d_model, 2, dtype=jnp.float32) * (-math.log(10000.0) / d_model)
    )                                                                        # (ceil(d/2),)
    angles = position * div_term                                             # (max_len, ceil(d/2))
    pe = jnp.zeros((max_len, d_model), dtype=jnp.float32)
    pe = pe.at[:, 0::2].set(jnp.sin(angles))
    pe = pe.at[:, 1::2].set(jnp.cos(angles[:, : d_model // 2]))
    return pe[:, None, :]                                                    # (max_len, 1, d)


# ---------------------------------------------------------------------------
# Pallas kernel: out(ts, B, D) = x(ts, B, D) + pe(ts, 1, D)   (broadcast over B)
# ---------------------------------------------------------------------------
def _pe_add_kernel(x_ref, pe_ref, o_ref):
    # Steady state: vld + vld + vadd + vst — purely HBM-bandwidth bound.
    o_ref[...] = (x_ref[...] + pe_ref[...]).astype(o_ref.dtype)


# ---------------------------------------------------------------------------
# Tile sizing
# ---------------------------------------------------------------------------
def _choose_tile_rows(n_rows: int, bytes_per_row: int, *,
                      byte_budget: int = 8 * 1024 * 1024,
                      min_steps: int = 8) -> int:
    """Sequence rows per grid step.

    `bytes_per_row` counts all double-buffered VMEM bytes one sequence row
    needs (2x x-in + 2x pe-in + 2x out).  Returns the full extent when
    n_rows <= 8, otherwise a multiple of 8, so the (8, 128) block rule is
    always satisfied.  The result exceeds `byte_budget` only when the minimum
    legal 8-row tile already does; the caller then raises vmem_limit_bytes.
    """
    if n_rows <= 8:
        return n_rows
    rows = (byte_budget // max(bytes_per_row, 1)) // 8 * 8
    rows = max(8, rows)
    # Keep >= min_steps grid steps when the sequence is long enough (v7x
    # megacore sharding + DMA/compute overlap need more than one step).
    cap = (n_rows // min_steps) // 8 * 8
    if cap >= 8:
        rows = min(rows, cap)
    return min(rows, (n_rows // 8) * 8)


# ---------------------------------------------------------------------------
# Wrapper
# ---------------------------------------------------------------------------
def positional_encoding_forward(x: jax.Array, pe: jax.Array) -> jax.Array:
    """x: (S, B, D) seq-first activations; pe: (max_len, 1, D) sinusoidal buffer."""
    S, B, D = x.shape
    max_len, one, d_pe = pe.shape
    if one != 1 or d_pe != D:
        raise ValueError(f"pe shape {pe.shape} incompatible with x shape {x.shape}")
    if S > max_len:
        raise ValueError(f"sequence length {S} exceeds max_len={max_len}")

    # Match torch promotion: bf16 x + f32 buffer -> f32 output.
    out_dtype = jnp.promote_types(x.dtype, pe.dtype)
    pe_s = pe[:S]                                          # (S, 1, D)

    in_b = B * D * jnp.dtype(x.dtype).itemsize
    pe_b = D * jnp.dtype(pe.dtype).itemsize
    out_b = B * D * jnp.dtype(out_dtype).itemsize
    bytes_per_row = 2 * (in_b + pe_b + out_b)              # double-buffered in/pe/out
    ts = _choose_tile_rows(S, bytes_per_row)

    # In-place add: alias output onto x when dtypes match.  Donate x at the
    # jit boundary (jax.jit(..., donate_argnums=(0,))) to avoid a defensive copy.
    aliases = {0: 0} if jnp.dtype(out_dtype) == jnp.dtype(x.dtype) else {}

    compiler_kwargs = dict(dimension_semantics=("parallel",))
    needed = ts * bytes_per_row + (2 << 20)                # headroom for temporaries
    if needed > 14 * 1024 * 1024:                          # above smallest default scoped limit (v5e)
        # TODO(synk): for extremely large B*D also tile the batch axis instead
        # of only raising the limit (keep total well under 64 MiB physical on v7x).
        compiler_kwargs["vmem_limit_bytes"] = int(min(needed, 128 * 1024 * 1024))

    return pl.pallas_call(
        _pe_add_kernel,
        out_shape=jax.ShapeDtypeStruct((S, B, D), out_dtype),
        grid=(pl.cdiv(S, ts),),
        in_specs=[
            pl.BlockSpec((ts, B, D), lambda s: (s, 0, 0)),   # x tile
            pl.BlockSpec((ts, 1, D), lambda s: (s, 0, 0)),   # pe tile, broadcast over B in-kernel
        ],
        out_specs=pl.BlockSpec((ts, B, D), lambda s: (s, 0, 0)),
        input_output_aliases=aliases,
        compiler_params=pltpu.CompilerParams(**compiler_kwargs),
    )(x, pe_s)


# ---------------------------------------------------------------------------
# Demo / self-check
# ---------------------------------------------------------------------------
if __name__ == "__main__":
    seq_len, batch, d_model = 8, 2, 32

    key = jax.random.PRNGKey(0)
    x = jax.random.normal(key, (seq_len, batch, d_model), dtype=jnp.float32)
    pe = make_positional_encoding(d_model, max_len=64)

    # Pure-JAX reference, computed BEFORE the (donating) kernel call.
    ref = x + pe[:seq_len]

    fwd = jax.jit(positional_encoding_forward, donate_argnums=(0,))
    out = jax.block_until_ready(fwd(x, pe))

    assert out.shape == (seq_len, batch, d_model)
    assert out.dtype == jnp.float32
    assert jnp.allclose(out, ref, atol=1e-5, rtol=1e-5)

    print("KERNEL_OK")
</pallas_src>

<mosaic_0001>
module attributes {stable_mosaic.version = 11 : i64} {
  func.func @_pe_add_kernel(%arg0: i32, %arg1: memref<8x2x32xf32, #tpu.memory_space<vmem>>, %arg2: memref<8x1x32xf32, #tpu.memory_space<vmem>>, %arg3: memref<8x2x32xf32, #tpu.memory_space<vmem>>) attributes {dimension_semantics = [#tpu.dimension_semantics<parallel>], iteration_bounds = array<i64: 1>, scalar_prefetch = 0 : i64, scratch_operands = 0 : i64, tpu.core_type = #tpu.core_type<tc>, window_params = [{transform_indices = @transform_0, window_bounds = array<i64: 8, 2, 32>}, {transform_indices = @transform_1, window_bounds = array<i64: 8, 1, 32>}, {transform_indices = @transform_2, window_bounds = array<i64: 8, 2, 32>}]} {
    %c0 = arith.constant 0 : index
    %c0_0 = arith.constant 0 : index
    %c0_1 = arith.constant 0 : index
    %0 = vector.load %arg1[%c0, %c0_0, %c0_1] : memref<8x2x32xf32, #tpu.memory_space<vmem>>, vector<8x2x32xf32>
    %c0_2 = arith.constant 0 : index
    %c0_3 = arith.constant 0 : index
    %c0_4 = arith.constant 0 : index
    %1 = vector.load %arg2[%c0_2, %c0_3, %c0_4] : memref<8x1x32xf32, #tpu.memory_space<vmem>>, vector<8x1x32xf32>
    %2 = vector.broadcast %1 : vector<8x1x32xf32> to vector<8x2x32xf32>
    %3 = arith.addf %0, %2 : vector<8x2x32xf32>
    %c0_5 = arith.constant 0 : index
    %c0_6 = arith.constant 0 : index
    %c0_7 = arith.constant 0 : index
    %4 = vector.load %arg3[%c0_5, %c0_6, %c0_7] : memref<8x2x32xf32, #tpu.memory_space<vmem>>, vector<8x2x32xf32>
    tpu.vector_store %arg3[%c0_5, %c0_6, %c0_7], %3 {strides = array<i32>} : memref<8x2x32xf32, #tpu.memory_space<vmem>>, vector<8x2x32xf32>,
    return
  }
  func.func @transform_0(%arg0: i32) -> (i32, i32, i32) {
    %c0_i32 = arith.constant 0 : i32
    %c0_i32_0 = arith.constant 0 : i32
    %c0_i32_1 = arith.constant 0 : i32
    return %arg0, %c0_i32, %c0_i32_0 : i32, i32, i32
  }
  func.func @transform_1(%arg0: i32) -> (i32, i32, i32) {
    %c0_i32 = arith.constant 0 : i32
    %c0_i32_0 = arith.constant 0 : i32
    %c0_i32_1 = arith.constant 0 : i32
    return %arg0, %c0_i32, %c0_i32_0 : i32, i32, i32
  }
  func.func @transform_2(%arg0: i32) -> (i32, i32, i32) {
    %c0_i32 = arith.constant 0 : i32
    %c0_i32_0 = arith.constant 0 : i32
    %c0_i32_1 = arith.constant 0 : i32
    return %arg0, %c0_i32, %c0_i32_0 : i32, i32, i32
  }
}

</mosaic_0001>

<llo_original>
// kernel: positional_encoding_forward.1
$region0: #{positional_encoding_forward.1}
  #allocation0 [shape = 'u32[]', space=smem, size = 0x4, offset = 0x4, fixed_abs, tag = 'smem constant byte address 0x4 - core index']
  #allocation1 [shape = 'u32[144,128]{1,0:T(1,128)}', space=vmem, size = 0x12000, scoped, tag = 'internal scratch']
  %s0 = inlined_call_operand.hbm [shape: f32[8,2,32], index: 0, kind: input, shape index: {}, may-alias: {0,2}]
  %s1 = inlined_call_operand.vmem [shape: f32[8,1,32], index: 1, kind: input, shape index: {}]
  %s2 = inlined_call_operand.hbm [shape: f32[8,2,32], index: 2, kind: output, shape index: {}, may-alias: {0,2}]
  %s3 = sld [smem:[#allocation0]]
  $region22: #{positional_encoding_forward.1} parent=0
    _
  %s5 = ssub.s32 1, %s3
  %s6 = scalar_select 0, %s5, %s3
  $region1: #{positional_encoding_forward.1} parent=0
    #allocation2 [shape = 'u8[8192]{0}', space=vmem, size = 0x2000, scoped, tag = 'input window, operand 0, single buffered']
    #allocation3 [shape = 's32[1]{0}', space=sflag, size = 0x4, scoped, tag = 'scoped memory for positional_encoding_forward.1']
    #allocation4 [shape = 's32[1]{0}', space=sflag, size = 0x4, scoped, tag = 'scoped memory for positional_encoding_forward.1']
    #allocation5 [shape = 'u8[8192]{0}', space=vmem, size = 0x2000, scoped, tag = 'output window, operand 0, single buffered']
    %7 = vsyncpa [#allocation3], 0
    %8 = vsyncpa [#allocation4], 0
    // Predicated region
    $region2: #{positional_encoding_forward.1} parent=1 // pred_check
      _
    $region3: #{positional_encoding_forward.1} parent=1 // pred_check_branch
      %10 = sbr.rel (0) target = $region5
    $region4: #{positional_encoding_forward.1} parent=1 // pred_region
      %s12 = ssub.s32 256, 256
      %13 = vsyncadd [#allocation3], %s12
      %s14 = sshll.u32 [#allocation2], 4
      %s15 = int_to_ptr.vmem [resolvable:$true] %s14
      %20 = dma.hbm_to_vmem [thread:$0]  %s0, 256, %s15, [#allocation3], 32, 32, 2
    $region5: #{positional_encoding_forward.1} parent=1 // pred_fallthru
      _
    // Predicated region
    $region6: #{positional_encoding_forward.1} parent=1 // pred_check
      _
    $region7: #{positional_encoding_forward.1} parent=1 // pred_check_branch
      %22 = sbr.rel (0) target = $region9
    $region8: #{positional_encoding_forward.1} parent=1 // pred_region
      _
    $region9: #{positional_encoding_forward.1} parent=1 // pred_fallthru
      _
    // Predicated region
    $region10: #{positional_encoding_forward.1} parent=1 // pred_check
      _
    $region11: #{positional_encoding_forward.1} parent=1 // pred_check_branch
      %24 = sbr.rel (0) target = $region13
    $region12: #{positional_encoding_forward.1} parent=1 // pred_region
      %25 = dma.done [#allocation3], 256
    $region13: #{positional_encoding_forward.1} parent=1 // pred_fallthru
      _
    %v26 = vld [vmem:[#allocation2] sm:$0x3]
    %v27 = vld [vmem:[#allocation2 + $0x2] sm:$0x3]
    %v28 = vld [vmem:[#allocation2 + $0x4] sm:$0x3]
    %v29 = vld [vmem:[#allocation2 + $0x6] sm:$0x3]
    %v30 = vld [vmem:[#allocation2 + $0x8] sm:$0x3]
    %v31 = vld [vmem:[#allocation2 + $0xa] sm:$0x3]
    %v32 = vld [vmem:[#allocation2 + $0xc] sm:$0x3]
    %v33 = vld [vmem:[#allocation2 + $0xe] sm:$0x3]
    %v34 = vld [vmem:[%s1] sm:$0x1]
    %v35 = vld [vmem:[%s1 + $0x1] sm:$0x1]
    %v36 = vld [vmem:[%s1 + $0x2] sm:$0x1]
    %v37 = vld [vmem:[%s1 + $0x3] sm:$0x1]
    %v38 = vld [vmem:[%s1 + $0x4] sm:$0x1]
    %v39 = vld [vmem:[%s1 + $0x5] sm:$0x1]
    %v40 = vld [vmem:[%s1 + $0x6] sm:$0x1]
    %v41 = vld [vmem:[%s1 + $0x7] sm:$0x1]
    %v50 = vlaneseq
    %v51 = vshrl.u32 %v50, 7
    %v52 = vsub.s32 0, %v51
    %v53 = vrot.slane %v34, %v52
    %v54 = vlaneseq
    %v55 = vshrl.u32 %v54, 7
    %v56 = vsub.s32 0, %v55
    %v57 = vrot.slane %v35, %v56
    %v58 = vlaneseq
    %v59 = vshrl.u32 %v58, 7
    %v60 = vsub.s32 0, %v59
    %v61 = vrot.slane %v36, %v60
    %v62 = vlaneseq
    %v63 = vshrl.u32 %v62, 7
    %v64 = vsub.s32 0, %v63
    %v65 = vrot.slane %v37, %v64
    %v66 = vlaneseq
    %v67 = vshrl.u32 %v66, 7
    %v68 = vsub.s32 0, %v67
    %v69 = vrot.slane %v38, %v68
    %v70 = vlaneseq
    %v71 = vshrl.u32 %v70, 7
    %v72 = vsub.s32 0, %v71
    %v73 = vrot.slane %v39, %v72
    %v74 = vlaneseq
    %v75 = vshrl.u32 %v74, 7
    %v76 = vsub.s32 0, %v75
    %v77 = vrot.slane %v40, %v76
    %v78 = vlaneseq
    %v79 = vshrl.u32 %v78, 7
    %v80 = vsub.s32 0, %v79
    %v81 = vrot.slane %v41, %v80
    %v90 = vadd.f32 %v26, %v53
    %v91 = vadd.f32 %v27, %v57
    %v92 = vadd.f32 %v28, %v61
    %v93 = vadd.f32 %v29, %v65
    %v94 = vadd.f32 %v30, %v69
    %v95 = vadd.f32 %v31, %v73
    %v96 = vadd.f32 %v32, %v77
    %v97 = vadd.f32 %v33, %v81
    %vm98 = vcmask 254976
    %99 = vst.msk [vmem:[#allocation5] sm:$0x3] %vm98, %v90
    %100 = vst.msk [vmem:[#allocation5 + $0x2] sm:$0x3] %vm98, %v91
    %101 = vst.msk [vmem:[#allocation5 + $0x4] sm:$0x3] %vm98, %v92
    %102 = vst.msk [vmem:[#allocation5 + $0x6] sm:$0x3] %vm98, %v93
    %103 = vst.msk [vmem:[#allocation5 + $0x8] sm:$0x3] %vm98, %v94
    %104 = vst.msk [vmem:[#allocation5 + $0xa] sm:$0x3] %vm98, %v95
    %105 = vst.msk [vmem:[#allocation5 + $0xc] sm:$0x3] %vm98, %v96
    %106 = vst.msk [vmem:[#allocation5 + $0xe] sm:$0x3] %vm98, %v97
    // Predicated region
    $region14: #{positional_encoding_forward.1} parent=1 // pred_check
      _
    $region15: #{positional_encoding_forward.1} parent=1 // pred_check_branch
      %108 = sbr.rel (0) target = $region17
    $region16: #{positional_encoding_forward.1} parent=1 // pred_region
      %s110 = ssub.s32 256, 256
      %111 = vsyncadd [#allocation4], %s110
      %s112 = sshll.u32 [#allocation5], 4
      %s113 = int_to_ptr.vmem [resolvable:$true] %s112
      %118 = dma.vmem_to_hbm [thread:$0]  %s113, 256, %s2, [#allocation4], 32, 32, 2
    $region17: #{positional_encoding_forward.1} parent=1 // pred_fallthru
      _
    // Predicated region
    $region18: #{positional_encoding_forward.1} parent=1 // pred_check
      _
    $region19: #{positional_encoding_forward.1} parent=1 // pred_check_branch
      %120 = sbr.rel (0) target = $region21
    $region20: #{positional_encoding_forward.1} parent=1 // pred_region
      %121 = dma.done [#allocation4], 256
    $region21: #{positional_encoding_forward.1} parent=1 // pred_fallthru
      _
    %122 = vsyncpa [#allocation3], 1
    %123 = vsyncpa [#allocation4], 1

</llo_original>
